<compile_context>
chip_gen: v5e
topology: v5e:2x2
jax: 0.10.0
libtpu: 0.0.40
codegen_flags: <defaults>
</compile_context>

<pallas_src>
import functools

import jax
import jax.numpy as jnp
from jax import lax
from jax.experimental import pallas as pl
from jax.experimental.pallas import tpu as pltpu

LARGE_NUMBER = 1e9


def sinusoidal_embeddings(seq_len, d_k):
    """Standard sinusoidal positional embeddings, shape (seq_len, d_k)."""
    pos = jnp.arange(seq_len, dtype=jnp.float32)[:, None]          # (S, 1)
    i = jnp.arange(d_k, dtype=jnp.float32)[None, :]                 # (1, d_k)
    angle_rates = 1.0 / jnp.power(10000.0, (2.0 * jnp.floor(i / 2.0)) / d_k)
    angles = pos * angle_rates                                      # (S, d_k)
    even = (jnp.arange(d_k) % 2) == 0
    return jnp.where(even[None, :], jnp.sin(angles), jnp.cos(angles))


def _batch_block_size(batch):
    """Batches handled per grid step (trace-time decision).

    v7x has 2 TensorCores per chip: keep one batch per program so
    dimension_semantics=("parallel",) shards the batch across both cores.
    v5e/v6e have a single TensorCore, where extra grid steps are pure
    per-step overhead (~0.35 us each) at these sizes: collapse the whole
    batch into one program so the projections run over B*S rows at once.
    """
    try:
        kind = jax.devices()[0].device_kind.lower()
    except Exception:
        kind = ""
    return 1 if "v7" in kind else batch


def _make_decoder_kernel(n_heads, d_k, seq_len, bt, d_model):
    scale = 1.0 / (d_k ** 0.5)

    def kernel(x_ref, wqkv_ref, wo_ref, pos_ref, out_ref):
        x = x_ref[...]                           # (bt*S, D) f32, reused as residual
        xb = x.astype(jnp.bfloat16)              # bf16 MXU operand
        pos = pos_ref[...].astype(jnp.float32)   # (S, D) per-head pos tiled along D

        # Fused QKV projection over all bt*S rows: one MXU matmul with 3*D
        # output lanes instead of three D-wide ones.
        qkv = jnp.dot(xb, wqkv_ref[...], preferred_element_type=jnp.float32)
        q = qkv[:, 0:d_model]
        k = qkv[:, d_model:2 * d_model]
        v = qkv[:, 2 * d_model:3 * d_model]

        # Causal additive mask built in-kernel (f32; zero HBM traffic).
        row = lax.broadcasted_iota(jnp.int32, (seq_len, seq_len), 0)
        col = lax.broadcasted_iota(jnp.int32, (seq_len, seq_len), 1)
        neg_mask = jnp.where(col > row, -LARGE_NUMBER, 0.0).astype(jnp.float32)

        wo = wo_ref[...]                         # (D, D) bf16

        # Static unroll over the (small) local batch block and heads.
        for b in range(bt):
            r0 = b * seq_len
            # Fold 1/sqrt(d_k) into q once; pos is added before scaling,
            # matching scores = (Q+pos)(K+pos)^T / sqrt(d_k).
            qb = ((q[r0:r0 + seq_len, :] + pos) * scale).astype(jnp.bfloat16)
            kb = (k[r0:r0 + seq_len, :] + pos).astype(jnp.bfloat16)
            vb = v[r0:r0 + seq_len, :].astype(jnp.bfloat16)

            # Accumulator seeded with the residual; each head's output-
            # projection contribution is added in f32 registers.  No scratch
            # round-trip, single write to out_ref per batch row-block.
            acc = x[r0:r0 + seq_len, :]

            for h in range(n_heads):
                lo, hi = h * d_k, (h + 1) * d_k
                qh = qb[:, lo:hi]                # (S, d_k) bf16
                kh = kb[:, lo:hi]
                vh = vb[:, lo:hi]
                # q @ k^T without an explicit transpose (MXU consumes K as-is).
                scores = lax.dot_general(
                    qh, kh, (((1,), (1,)), ((), ())),
                    preferred_element_type=jnp.float32) + neg_mask
                m = jnp.max(scores, axis=-1, keepdims=True)   # f32 softmax math
                e = jnp.exp(scores - m)
                inv = pl.reciprocal(jnp.sum(e, axis=-1, keepdims=True),
                                    approx=True)
                attn_h = jnp.dot((e * inv).astype(jnp.bfloat16), vh,
                                 preferred_element_type=jnp.float32)
                # Per-head slice of the output projection, accumulated in f32.
                acc = acc + jnp.dot(attn_h.astype(jnp.bfloat16), wo[lo:hi, :],
                                    preferred_element_type=jnp.float32)

            out_ref[r0:r0 + seq_len, :] = acc

    return kernel


@functools.partial(jax.jit, static_argnames=("n_heads",))
def decoder_layer_pallas(x, wq_t, wk_t, wv_t, wo_t, n_heads):
    """x: (B, S, D) f32; w*_t: (D_in, D_out) pre-transposed linear weights."""
    B, S, D = x.shape
    d_k = D // n_heads

    bt = _batch_block_size(B)                  # static: 1 on v7x, B on v5e/v6e
    grid = (B // bt,)

    # Per-head positional embedding tiled along D, bf16 (halves the DMA).
    pos = sinusoidal_embeddings(S, d_k)                          # (S, d_k)
    pos_full = jnp.tile(pos, (1, n_heads)).astype(jnp.bfloat16)  # (S, D)

    # Fused QKV weight (D, 3D) + output projection weight, both bf16
    # (MXU-native operands, half the weight HBM traffic).
    wqkv = jnp.concatenate([wq_t, wk_t, wv_t], axis=1).astype(jnp.bfloat16)
    wo_b = wo_t.astype(jnp.bfloat16)

    # Flatten batch/seq in the wrapper so the projections run over bt*S rows
    # per program (free XLA reshape; reshaped back after the call).
    x2 = x.reshape(B * S, D)

    kernel = _make_decoder_kernel(n_heads, d_k, S, bt, D)

    y2 = pl.pallas_call(
        kernel,
        out_shape=jax.ShapeDtypeStruct((B * S, D), jnp.float32),
        grid_spec=pltpu.PrefetchScalarGridSpec(
            num_scalar_prefetch=0,
            grid=grid,
            in_specs=[
                pl.BlockSpec((bt * S, D), lambda i: (i, 0)),     # x row block (f32)
                pl.BlockSpec((D, 3 * D), lambda i: (0, 0)),      # W_qkv^T (bf16)
                pl.BlockSpec((D, D), lambda i: (0, 0)),          # W_o^T (bf16)
                pl.BlockSpec((S, D), lambda i: (0, 0)),          # pos emb (bf16)
            ],
            out_specs=pl.BlockSpec((bt * S, D), lambda i: (i, 0)),
        ),
        compiler_params=pltpu.CompilerParams(
            dimension_semantics=("parallel",),
            # Working set is < 1 MiB; do not request all of v7x's 64 MiB VMEM.
            vmem_limit_bytes=32 * 1024 * 1024,
        ),
    )(x2, wqkv, wo_b, pos_full)

    return y2.reshape(B, S, D)


def decoder_layer_reference(x, wq_t, wk_t, wv_t, wo_t, n_heads):
    """Pure-JAX f32 reference mirroring the torch forward (defaults)."""
    B, S, D = x.shape
    d_k = D // n_heads
    q = x @ wq_t
    k = x @ wk_t
    v = x @ wv_t
    q = q.reshape(B, S, n_heads, d_k).transpose(0, 2, 1, 3)
    k = k.reshape(B, S, n_heads, d_k).transpose(0, 2, 1, 3)
    v = v.reshape(B, S, n_heads, d_k).transpose(0, 2, 1, 3)
    pos = sinusoidal_embeddings(S, d_k)
    q = q + pos
    k = k + pos
    mask = jnp.triu(jnp.ones((S, S), jnp.float32), k=1) * -LARGE_NUMBER
    scores = jnp.einsum("bhqd,bhkd->bhqk", q, k) / (d_k ** 0.5) + mask
    w = jax.nn.softmax(scores, axis=-1)
    attn = jnp.einsum("bhqk,bhkd->bhqd", w, v)
    attn = attn.transpose(0, 2, 1, 3).reshape(B, S, D)
    return attn @ wo_t + x


if __name__ == "__main__":
    B, S, D_MODEL, N_HEADS = 2, 8, 32, 4

    key = jax.random.PRNGKey(0)
    kx, kq, kk, kv, ko = jax.random.split(key, 5)

    x = jax.random.normal(kx, (B, S, D_MODEL), dtype=jnp.float32)
    # torch Linear weight is (out, in); we build (out, in) then pass W.T = (in, out).
    bound = 1.0 / (D_MODEL ** 0.5)
    wq = jax.random.uniform(kq, (D_MODEL, D_MODEL), jnp.float32, -bound, bound)
    wk = jax.random.uniform(kk, (D_MODEL, D_MODEL), jnp.float32, -bound, bound)
    wv = jax.random.uniform(kv, (D_MODEL, D_MODEL), jnp.float32, -bound, bound)
    wo = jax.random.uniform(ko, (D_MODEL, D_MODEL), jnp.float32, -bound, bound)

    y = decoder_layer_pallas(x, wq.T, wk.T, wv.T, wo.T, N_HEADS)
    y = jax.block_until_ready(y)

    y_ref = decoder_layer_reference(x, wq.T, wk.T, wv.T, wo.T, N_HEADS)
    assert y.shape == (B, S, D_MODEL)
    # bf16 MXU operands (f32 accumulation) => loosened tolerance vs f32 reference.
    assert jnp.allclose(y, y_ref, atol=2e-2, rtol=2e-2), "mismatch vs reference"

    print("KERNEL_OK")
</pallas_src>

<mosaic_0001>
module attributes {stable_mosaic.version = 11 : i64} {
  func.func @kernel(%arg0: i32, %arg1: memref<16x32xf32, #tpu.memory_space<vmem>>, %arg2: memref<32x96xbf16, #tpu.memory_space<vmem>>, %arg3: memref<32x32xbf16, #tpu.memory_space<vmem>>, %arg4: memref<8x32xbf16, #tpu.memory_space<vmem>>, %arg5: memref<16x32xf32, #tpu.memory_space<vmem>>) attributes {dimension_semantics = [#tpu.dimension_semantics<parallel>], iteration_bounds = array<i64: 1>, scalar_prefetch = 0 : i64, scratch_operands = 0 : i64, tpu.core_type = #tpu.core_type<tc>, window_params = [{transform_indices = @transform_0, window_bounds = array<i64: 16, 32>}, {pipeline_mode = #tpu.pipeline_mode<synchronous>, transform_indices = @transform_1, window_bounds = array<i64: 32, 96>}, {pipeline_mode = #tpu.pipeline_mode<synchronous>, transform_indices = @transform_2, window_bounds = array<i64: 32, 32>}, {pipeline_mode = #tpu.pipeline_mode<synchronous>, transform_indices = @transform_3, window_bounds = array<i64: 8, 32>}, {transform_indices = @transform_4, window_bounds = array<i64: 16, 32>}]} {
    %c0 = arith.constant 0 : index
    %c0_0 = arith.constant 0 : index
    %0 = vector.load %arg1[%c0, %c0_0] : memref<16x32xf32, #tpu.memory_space<vmem>>, vector<16x32xf32>
    %1 = arith.truncf %0 : vector<16x32xf32> to vector<16x32xbf16>
    %c0_1 = arith.constant 0 : index
    %c0_2 = arith.constant 0 : index
    %2 = vector.load %arg4[%c0_1, %c0_2] : memref<8x32xbf16, #tpu.memory_space<vmem>>, vector<8x32xbf16>
    %3 = arith.extf %2 : vector<8x32xbf16> to vector<8x32xf32>
    %c0_3 = arith.constant 0 : index
    %c0_4 = arith.constant 0 : index
    %4 = vector.load %arg2[%c0_3, %c0_4] : memref<32x96xbf16, #tpu.memory_space<vmem>>, vector<32x96xbf16>
    %cst = arith.constant dense<0.000000e+00> : vector<16x96xf32>
    %5 = tpu.matmul %1, %4, %cst {dimension_numbers = #tpu.dot_dimension_numbers<[1], [0], [0], [1], [0, 0, 1, 1], [], []>} : vector<16x32xbf16>, vector<32x96xbf16>, vector<16x96xf32> -> vector<16x96xf32>
    %6 = vector.extract_strided_slice %5 {offsets = [0, 0], sizes = [16, 32], strides = [1, 1]} : vector<16x96xf32> to vector<16x32xf32>
    %7 = vector.extract_strided_slice %5 {offsets = [0, 32], sizes = [16, 32], strides = [1, 1]} : vector<16x96xf32> to vector<16x32xf32>
    %8 = vector.extract_strided_slice %5 {offsets = [0, 64], sizes = [16, 32], strides = [1, 1]} : vector<16x96xf32> to vector<16x32xf32>
    %9 = tpu.iota {dimensions = array<i32: 0>} : vector<8x8xi32>
    %10 = tpu.iota {dimensions = array<i32: 1>} : vector<8x8xi32>
    %11 = arith.cmpi sgt, %10, %9 : vector<8x8xi32>
    %cst_5 = arith.constant -1.000000e+09 : f32
    %cst_6 = arith.constant 0.000000e+00 : f32
    %12 = vector.broadcast %cst_5 : f32 to vector<8x8xf32>
    %13 = vector.broadcast %cst_6 : f32 to vector<8x8xf32>
    %14 = arith.select %11, %12, %13 : vector<8x8xi1>, vector<8x8xf32>
    %c0_7 = arith.constant 0 : index
    %c0_8 = arith.constant 0 : index
    %15 = vector.load %arg3[%c0_7, %c0_8] : memref<32x32xbf16, #tpu.memory_space<vmem>>, vector<32x32xbf16>
    %16 = vector.extract_strided_slice %6 {offsets = [0, 0], sizes = [8, 32], strides = [1, 1]} : vector<16x32xf32> to vector<8x32xf32>
    %17 = arith.addf %16, %3 : vector<8x32xf32>
    %cst_9 = arith.constant 0.353553385 : f32
    %18 = vector.broadcast %cst_9 : f32 to vector<8x32xf32>
    %19 = arith.mulf %17, %18 : vector<8x32xf32>
    %20 = arith.truncf %19 : vector<8x32xf32> to vector<8x32xbf16>
    %21 = vector.extract_strided_slice %7 {offsets = [0, 0], sizes = [8, 32], strides = [1, 1]} : vector<16x32xf32> to vector<8x32xf32>
    %22 = arith.addf %21, %3 : vector<8x32xf32>
    %23 = arith.truncf %22 : vector<8x32xf32> to vector<8x32xbf16>
    %24 = vector.extract_strided_slice %8 {offsets = [0, 0], sizes = [8, 32], strides = [1, 1]} : vector<16x32xf32> to vector<8x32xf32>
    %25 = arith.truncf %24 : vector<8x32xf32> to vector<8x32xbf16>
    %26 = vector.extract_strided_slice %0 {offsets = [0, 0], sizes = [8, 32], strides = [1, 1]} : vector<16x32xf32> to vector<8x32xf32>
    %27 = vector.extract_strided_slice %20 {offsets = [0, 0], sizes = [8, 8], strides = [1, 1]} : vector<8x32xbf16> to vector<8x8xbf16>
    %28 = vector.extract_strided_slice %23 {offsets = [0, 0], sizes = [8, 8], strides = [1, 1]} : vector<8x32xbf16> to vector<8x8xbf16>
    %29 = vector.extract_strided_slice %25 {offsets = [0, 0], sizes = [8, 8], strides = [1, 1]} : vector<8x32xbf16> to vector<8x8xbf16>
    %cst_10 = arith.constant dense<0.000000e+00> : vector<8x8xf32>
    %30 = tpu.matmul %27, %28, %cst_10 {dimension_numbers = #tpu.dot_dimension_numbers<[1], [1], [0], [0], [0, 0, 1, 0], [], []>} : vector<8x8xbf16>, vector<8x8xbf16>, vector<8x8xf32> -> vector<8x8xf32>
    %31 = arith.addf %30, %14 : vector<8x8xf32>
    %cst_11 = arith.constant dense<0xFF800000> : vector<8xf32>
    %32 = vector.multi_reduction <maximumf>, %31, %cst_11 [1] : vector<8x8xf32> to vector<8xf32>
    %33 = vector.shape_cast %32 : vector<8xf32> to vector<8x1xf32>
    %34 = vector.broadcast %33 : vector<8x1xf32> to vector<8x8xf32>
    %35 = arith.subf %31, %34 : vector<8x8xf32>
    %36 = math.exp %35 : vector<8x8xf32>
    %cst_12 = arith.constant dense<0.000000e+00> : vector<8xf32>
    %37 = vector.multi_reduction <add>, %36, %cst_12 [1] : vector<8x8xf32> to vector<8xf32>
    %38 = vector.shape_cast %37 : vector<8xf32> to vector<8x1xf32>
    %39 = tpu.reciprocal %38 {approx = true} : vector<8x1xf32> -> vector<8x1xf32>
    %40 = vector.broadcast %39 : vector<8x1xf32> to vector<8x8xf32>
    %41 = arith.mulf %36, %40 : vector<8x8xf32>
    %42 = arith.truncf %41 : vector<8x8xf32> to vector<8x8xbf16>
    %cst_13 = arith.constant dense<0.000000e+00> : vector<8x8xf32>
    %43 = tpu.matmul %42, %29, %cst_13 {dimension_numbers = #tpu.dot_dimension_numbers<[1], [0], [0], [1], [0, 0, 1, 1], [], []>} : vector<8x8xbf16>, vector<8x8xbf16>, vector<8x8xf32> -> vector<8x8xf32>
    %44 = arith.truncf %43 : vector<8x8xf32> to vector<8x8xbf16>
    %45 = vector.extract_strided_slice %15 {offsets = [0, 0], sizes = [8, 32], strides = [1, 1]} : vector<32x32xbf16> to vector<8x32xbf16>
    %cst_14 = arith.constant dense<0.000000e+00> : vector<8x32xf32>
    %46 = tpu.matmul %44, %45, %cst_14 {dimension_numbers = #tpu.dot_dimension_numbers<[1], [0], [0], [1], [0, 0, 1, 1], [], []>} : vector<8x8xbf16>, vector<8x32xbf16>, vector<8x32xf32> -> vector<8x32xf32>
    %47 = arith.addf %26, %46 : vector<8x32xf32>
    %48 = vector.extract_strided_slice %20 {offsets = [0, 8], sizes = [8, 8], strides = [1, 1]} : vector<8x32xbf16> to vector<8x8xbf16>
    %49 = vector.extract_strided_slice %23 {offsets = [0, 8], sizes = [8, 8], strides = [1, 1]} : vector<8x32xbf16> to vector<8x8xbf16>
    %50 = vector.extract_strided_slice %25 {offsets = [0, 8], sizes = [8, 8], strides = [1, 1]} : vector<8x32xbf16> to vector<8x8xbf16>
    %cst_15 = arith.constant dense<0.000000e+00> : vector<8x8xf32>
    %51 = tpu.matmul %48, %49, %cst_15 {dimension_numbers = #tpu.dot_dimension_numbers<[1], [1], [0], [0], [0, 0, 1, 0], [], []>} : vector<8x8xbf16>, vector<8x8xbf16>, vector<8x8xf32> -> vector<8x8xf32>
    %52 = arith.addf %51, %14 : vector<8x8xf32>
    %cst_16 = arith.constant dense<0xFF800000> : vector<8xf32>
    %53 = vector.multi_reduction <maximumf>, %52, %cst_16 [1] : vector<8x8xf32> to vector<8xf32>
    %54 = vector.shape_cast %53 : vector<8xf32> to vector<8x1xf32>
    %55 = vector.broadcast %54 : vector<8x1xf32> to vector<8x8xf32>
    %56 = arith.subf %52, %55 : vector<8x8xf32>
    %57 = math.exp %56 : vector<8x8xf32>
    %cst_17 = arith.constant dense<0.000000e+00> : vector<8xf32>
    %58 = vector.multi_reduction <add>, %57, %cst_17 [1] : vector<8x8xf32> to vector<8xf32>
    %59 = vector.shape_cast %58 : vector<8xf32> to vector<8x1xf32>
    %60 = tpu.reciprocal %59 {approx = true} : vector<8x1xf32> -> vector<8x1xf32>
    %61 = vector.broadcast %60 : vector<8x1xf32> to vector<8x8xf32>
    %62 = arith.mulf %57, %61 : vector<8x8xf32>
    %63 = arith.truncf %62 : vector<8x8xf32> to vector<8x8xbf16>
    %cst_18 = arith.constant dense<0.000000e+00> : vector<8x8xf32>
    %64 = tpu.matmul %63, %50, %cst_18 {dimension_numbers = #tpu.dot_dimension_numbers<[1], [0], [0], [1], [0, 0, 1, 1], [], []>} : vector<8x8xbf16>, vector<8x8xbf16>, vector<8x8xf32> -> vector<8x8xf32>
    %65 = arith.truncf %64 : vector<8x8xf32> to vector<8x8xbf16>
    %66 = vector.extract_strided_slice %15 {offsets = [8, 0], sizes = [8, 32], strides = [1, 1]} : vector<32x32xbf16> to vector<8x32xbf16>
    %cst_19 = arith.constant dense<0.000000e+00> : vector<8x32xf32>
    %67 = tpu.matmul %65, %66, %cst_19 {dimension_numbers = #tpu.dot_dimension_numbers<[1], [0], [0], [1], [0, 0, 1, 1], [], []>} : vector<8x8xbf16>, vector<8x32xbf16>, vector<8x32xf32> -> vector<8x32xf32>
    %68 = arith.addf %47, %67 : vector<8x32xf32>
    %69 = vector.extract_strided_slice %20 {offsets = [0, 16], sizes = [8, 8], strides = [1, 1]} : vector<8x32xbf16> to vector<8x8xbf16>
    %70 = vector.extract_strided_slice %23 {offsets = [0, 16], sizes = [8, 8], strides = [1, 1]} : vector<8x32xbf16> to vector<8x8xbf16>
    %71 = vector.extract_strided_slice %25 {offsets = [0, 16], sizes = [8, 8], strides = [1, 1]} : vector<8x32xbf16> to vector<8x8xbf16>
    %cst_20 = arith.constant dense<0.000000e+00> : vector<8x8xf32>
    %72 = tpu.matmul %69, %70, %cst_20 {dimension_numbers = #tpu.dot_dimension_numbers<[1], [1], [0], [0], [0, 0, 1, 0], [], []>} : vector<8x8xbf16>, vector<8x8xbf16>, vector<8x8xf32> -> vector<8x8xf32>
    %73 = arith.addf %72, %14 : vector<8x8xf32>
    %cst_21 = arith.constant dense<0xFF800000> : vector<8xf32>
    %74 = vector.multi_reduction <maximumf>, %73, %cst_21 [1] : vector<8x8xf32> to vector<8xf32>
    %75 = vector.shape_cast %74 : vector<8xf32> to vector<8x1xf32>
    %76 = vector.broadcast %75 : vector<8x1xf32> to vector<8x8xf32>
    %77 = arith.subf %73, %76 : vector<8x8xf32>
    %78 = math.exp %77 : vector<8x8xf32>
    %cst_22 = arith.constant dense<0.000000e+00> : vector<8xf32>
    %79 = vector.multi_reduction <add>, %78, %cst_22 [1] : vector<8x8xf32> to vector<8xf32>
    %80 = vector.shape_cast %79 : vector<8xf32> to vector<8x1xf32>
    %81 = tpu.reciprocal %80 {approx = true} : vector<8x1xf32> -> vector<8x1xf32>
    %82 = vector.broadcast %81 : vector<8x1xf32> to vector<8x8xf32>
    %83 = arith.mulf %78, %82 : vector<8x8xf32>
    %84 = arith.truncf %83 : vector<8x8xf32> to vector<8x8xbf16>
    %cst_23 = arith.constant dense<0.000000e+00> : vector<8x8xf32>
    %85 = tpu.matmul %84, %71, %cst_23 {dimension_numbers = #tpu.dot_dimension_numbers<[1], [0], [0], [1], [0, 0, 1, 1], [], []>} : vector<8x8xbf16>, vector<8x8xbf16>, vector<8x8xf32> -> vector<8x8xf32>
    %86 = arith.truncf %85 : vector<8x8xf32> to vector<8x8xbf16>
    %87 = vector.extract_strided_slice %15 {offsets = [16, 0], sizes = [8, 32], strides = [1, 1]} : vector<32x32xbf16> to vector<8x32xbf16>
    %cst_24 = arith.constant dense<0.000000e+00> : vector<8x32xf32>
    %88 = tpu.matmul %86, %87, %cst_24 {dimension_numbers = #tpu.dot_dimension_numbers<[1], [0], [0], [1], [0, 0, 1, 1], [], []>} : vector<8x8xbf16>, vector<8x32xbf16>, vector<8x32xf32> -> vector<8x32xf32>
    %89 = arith.addf %68, %88 : vector<8x32xf32>
    %90 = vector.extract_strided_slice %20 {offsets = [0, 24], sizes = [8, 8], strides = [1, 1]} : vector<8x32xbf16> to vector<8x8xbf16>
    %91 = vector.extract_strided_slice %23 {offsets = [0, 24], sizes = [8, 8], strides = [1, 1]} : vector<8x32xbf16> to vector<8x8xbf16>
    %92 = vector.extract_strided_slice %25 {offsets = [0, 24], sizes = [8, 8], strides = [1, 1]} : vector<8x32xbf16> to vector<8x8xbf16>
    %cst_25 = arith.constant dense<0.000000e+00> : vector<8x8xf32>
    %93 = tpu.matmul %90, %91, %cst_25 {dimension_numbers = #tpu.dot_dimension_numbers<[1], [1], [0], [0], [0, 0, 1, 0], [], []>} : vector<8x8xbf16>, vector<8x8xbf16>, vector<8x8xf32> -> vector<8x8xf32>
    %94 = arith.addf %93, %14 : vector<8x8xf32>
    %cst_26 = arith.constant dense<0xFF800000> : vector<8xf32>
    %95 = vector.multi_reduction <maximumf>, %94, %cst_26 [1] : vector<8x8xf32> to vector<8xf32>
    %96 = vector.shape_cast %95 : vector<8xf32> to vector<8x1xf32>
    %97 = vector.broadcast %96 : vector<8x1xf32> to vector<8x8xf32>
    %98 = arith.subf %94, %97 : vector<8x8xf32>
    %99 = math.exp %98 : vector<8x8xf32>
    %cst_27 = arith.constant dense<0.000000e+00> : vector<8xf32>
    %100 = vector.multi_reduction <add>, %99, %cst_27 [1] : vector<8x8xf32> to vector<8xf32>
    %101 = vector.shape_cast %100 : vector<8xf32> to vector<8x1xf32>
    %102 = tpu.reciprocal %101 {approx = true} : vector<8x1xf32> -> vector<8x1xf32>
    %103 = vector.broadcast %102 : vector<8x1xf32> to vector<8x8xf32>
    %104 = arith.mulf %99, %103 : vector<8x8xf32>
    %105 = arith.truncf %104 : vector<8x8xf32> to vector<8x8xbf16>
    %cst_28 = arith.constant dense<0.000000e+00> : vector<8x8xf32>
    %106 = tpu.matmul %105, %92, %cst_28 {dimension_numbers = #tpu.dot_dimension_numbers<[1], [0], [0], [1], [0, 0, 1, 1], [], []>} : vector<8x8xbf16>, vector<8x8xbf16>, vector<8x8xf32> -> vector<8x8xf32>
    %107 = arith.truncf %106 : vector<8x8xf32> to vector<8x8xbf16>
    %108 = vector.extract_strided_slice %15 {offsets = [24, 0], sizes = [8, 32], strides = [1, 1]} : vector<32x32xbf16> to vector<8x32xbf16>
    %cst_29 = arith.constant dense<0.000000e+00> : vector<8x32xf32>
    %109 = tpu.matmul %107, %108, %cst_29 {dimension_numbers = #tpu.dot_dimension_numbers<[1], [0], [0], [1], [0, 0, 1, 1], [], []>} : vector<8x8xbf16>, vector<8x32xbf16>, vector<8x32xf32> -> vector<8x32xf32>
    %110 = arith.addf %89, %109 : vector<8x32xf32>
    %c0_30 = arith.constant 0 : index
    %c0_31 = arith.constant 0 : index
    %111 = vector.load %arg5[%c0_30, %c0_31] : memref<16x32xf32, #tpu.memory_space<vmem>>, vector<8x32xf32>
    tpu.vector_store %arg5[%c0_30, %c0_31], %110 {strides = array<i32>} : memref<16x32xf32, #tpu.memory_space<vmem>>, vector<8x32xf32>,
    %112 = vector.extract_strided_slice %6 {offsets = [8, 0], sizes = [8, 32], strides = [1, 1]} : vector<16x32xf32> to vector<8x32xf32>
    %113 = arith.addf %112, %3 : vector<8x32xf32>
    %cst_32 = arith.constant 0.353553385 : f32
    %114 = vector.broadcast %cst_32 : f32 to vector<8x32xf32>
    %115 = arith.mulf %113, %114 : vector<8x32xf32>
    %116 = arith.truncf %115 : vector<8x32xf32> to vector<8x32xbf16>
    %117 = vector.extract_strided_slice %7 {offsets = [8, 0], sizes = [8, 32], strides = [1, 1]} : vector<16x32xf32> to vector<8x32xf32>
    %118 = arith.addf %117, %3 : vector<8x32xf32>
    %119 = arith.truncf %118 : vector<8x32xf32> to vector<8x32xbf16>
    %120 = vector.extract_strided_slice %8 {offsets = [8, 0], sizes = [8, 32], strides = [1, 1]} : vector<16x32xf32> to vector<8x32xf32>
    %121 = arith.truncf %120 : vector<8x32xf32> to vector<8x32xbf16>
    %122 = vector.extract_strided_slice %0 {offsets = [8, 0], sizes = [8, 32], strides = [1, 1]} : vector<16x32xf32> to vector<8x32xf32>
    %123 = vector.extract_strided_slice %116 {offsets = [0, 0], sizes = [8, 8], strides = [1, 1]} : vector<8x32xbf16> to vector<8x8xbf16>
    %124 = vector.extract_strided_slice %119 {offsets = [0, 0], sizes = [8, 8], strides = [1, 1]} : vector<8x32xbf16> to vector<8x8xbf16>
    %125 = vector.extract_strided_slice %121 {offsets = [0, 0], sizes = [8, 8], strides = [1, 1]} : vector<8x32xbf16> to vector<8x8xbf16>
    %cst_33 = arith.constant dense<0.000000e+00> : vector<8x8xf32>
    %126 = tpu.matmul %123, %124, %cst_33 {dimension_numbers = #tpu.dot_dimension_numbers<[1], [1], [0], [0], [0, 0, 1, 0], [], []>} : vector<8x8xbf16>, vector<8x8xbf16>, vector<8x8xf32> -> vector<8x8xf32>
    %127 = arith.addf %126, %14 : vector<8x8xf32>
    %cst_34 = arith.constant dense<0xFF800000> : vector<8xf32>
    %128 = vector.multi_reduction <maximumf>, %127, %cst_34 [1] : vector<8x8xf32> to vector<8xf32>
    %129 = vector.shape_cast %128 : vector<8xf32> to vector<8x1xf32>
    %130 = vector.broadcast %129 : vector<8x1xf32> to vector<8x8xf32>
    %131 = arith.subf %127, %130 : vector<8x8xf32>
    %132 = math.exp %131 : vector<8x8xf32>
    %cst_35 = arith.constant dense<0.000000e+00> : vector<8xf32>
    %133 = vector.multi_reduction <add>, %132, %cst_35 [1] : vector<8x8xf32> to vector<8xf32>
    %134 = vector.shape_cast %133 : vector<8xf32> to vector<8x1xf32>
    %135 = tpu.reciprocal %134 {approx = true} : vector<8x1xf32> -> vector<8x1xf32>
    %136 = vector.broadcast %135 : vector<8x1xf32> to vector<8x8xf32>
    %137 = arith.mulf %132, %136 : vector<8x8xf32>
    %138 = arith.truncf %137 : vector<8x8xf32> to vector<8x8xbf16>
    %cst_36 = arith.constant dense<0.000000e+00> : vector<8x8xf32>
    %139 = tpu.matmul %138, %125, %cst_36 {dimension_numbers = #tpu.dot_dimension_numbers<[1], [0], [0], [1], [0, 0, 1, 1], [], []>} : vector<8x8xbf16>, vector<8x8xbf16>, vector<8x8xf32> -> vector<8x8xf32>
    %140 = arith.truncf %139 : vector<8x8xf32> to vector<8x8xbf16>
    %141 = vector.extract_strided_slice %15 {offsets = [0, 0], sizes = [8, 32], strides = [1, 1]} : vector<32x32xbf16> to vector<8x32xbf16>
    %cst_37 = arith.constant dense<0.000000e+00> : vector<8x32xf32>
    %142 = tpu.matmul %140, %141, %cst_37 {dimension_numbers = #tpu.dot_dimension_numbers<[1], [0], [0], [1], [0, 0, 1, 1], [], []>} : vector<8x8xbf16>, vector<8x32xbf16>, vector<8x32xf32> -> vector<8x32xf32>
    %143 = arith.addf %122, %142 : vector<8x32xf32>
    %144 = vector.extract_strided_slice %116 {offsets = [0, 8], sizes = [8, 8], strides = [1, 1]} : vector<8x32xbf16> to vector<8x8xbf16>
    %145 = vector.extract_strided_slice %119 {offsets = [0, 8], sizes = [8, 8], strides = [1, 1]} : vector<8x32xbf16> to vector<8x8xbf16>
    %146 = vector.extract_strided_slice %121 {offsets = [0, 8], sizes = [8, 8], strides = [1, 1]} : vector<8x32xbf16> to vector<8x8xbf16>
    %cst_38 = arith.constant dense<0.000000e+00> : vector<8x8xf32>
    %147 = tpu.matmul %144, %145, %cst_38 {dimension_numbers = #tpu.dot_dimension_numbers<[1], [1], [0], [0], [0, 0, 1, 0], [], []>} : vector<8x8xbf16>, vector<8x8xbf16>, vector<8x8xf32> -> vector<8x8xf32>
    %148 = arith.addf %147, %14 : vector<8x8xf32>
    %cst_39 = arith.constant dense<0xFF800000> : vector<8xf32>
    %149 = vector.multi_reduction <maximumf>, %148, %cst_39 [1] : vector<8x8xf32> to vector<8xf32>
    %150 = vector.shape_cast %149 : vector<8xf32> to vector<8x1xf32>
    %151 = vector.broadcast %150 : vector<8x1xf32> to vector<8x8xf32>
    %152 = arith.subf %148, %151 : vector<8x8xf32>
    %153 = math.exp %152 : vector<8x8xf32>
    %cst_40 = arith.constant dense<0.000000e+00> : vector<8xf32>
    %154 = vector.multi_reduction <add>, %153, %cst_40 [1] : vector<8x8xf32> to vector<8xf32>
    %155 = vector.shape_cast %154 : vector<8xf32> to vector<8x1xf32>
    %156 = tpu.reciprocal %155 {approx = true} : vector<8x1xf32> -> vector<8x1xf32>
    %157 = vector.broadcast %156 : vector<8x1xf32> to vector<8x8xf32>
    %158 = arith.mulf %153, %157 : vector<8x8xf32>
    %159 = arith.truncf %158 : vector<8x8xf32> to vector<8x8xbf16>
    %cst_41 = arith.constant dense<0.000000e+00> : vector<8x8xf32>
    %160 = tpu.matmul %159, %146, %cst_41 {dimension_numbers = #tpu.dot_dimension_numbers<[1], [0], [0], [1], [0, 0, 1, 1], [], []>} : vector<8x8xbf16>, vector<8x8xbf16>, vector<8x8xf32> -> vector<8x8xf32>
    %161 = arith.truncf %160 : vector<8x8xf32> to vector<8x8xbf16>
    %162 = vector.extract_strided_slice %15 {offsets = [8, 0], sizes = [8, 32], strides = [1, 1]} : vector<32x32xbf16> to vector<8x32xbf16>
    %cst_42 = arith.constant dense<0.000000e+00> : vector<8x32xf32>
    %163 = tpu.matmul %161, %162, %cst_42 {dimension_numbers = #tpu.dot_dimension_numbers<[1], [0], [0], [1], [0, 0, 1, 1], [], []>} : vector<8x8xbf16>, vector<8x32xbf16>, vector<8x32xf32> -> vector<8x32xf32>
    %164 = arith.addf %143, %163 : vector<8x32xf32>
    %165 = vector.extract_strided_slice %116 {offsets = [0, 16], sizes = [8, 8], strides = [1, 1]} : vector<8x32xbf16> to vector<8x8xbf16>
    %166 = vector.extract_strided_slice %119 {offsets = [0, 16], sizes = [8, 8], strides = [1, 1]} : vector<8x32xbf16> to vector<8x8xbf16>
    %167 = vector.extract_strided_slice %121 {offsets = [0, 16], sizes = [8, 8], strides = [1, 1]} : vector<8x32xbf16> to vector<8x8xbf16>
    %cst_43 = arith.constant dense<0.000000e+00> : vector<8x8xf32>
    %168 = tpu.matmul %165, %166, %cst_43 {dimension_numbers = #tpu.dot_dimension_numbers<[1], [1], [0], [0], [0, 0, 1, 0], [], []>} : vector<8x8xbf16>, vector<8x8xbf16>, vector<8x8xf32> -> vector<8x8xf32>
    %169 = arith.addf %168, %14 : vector<8x8xf32>
    %cst_44 = arith.constant dense<0xFF800000> : vector<8xf32>
    %170 = vector.multi_reduction <maximumf>, %169, %cst_44 [1] : vector<8x8xf32> to vector<8xf32>
    %171 = vector.shape_cast %170 : vector<8xf32> to vector<8x1xf32>
    %172 = vector.broadcast %171 : vector<8x1xf32> to vector<8x8xf32>
    %173 = arith.subf %169, %172 : vector<8x8xf32>
    %174 = math.exp %173 : vector<8x8xf32>
    %cst_45 = arith.constant dense<0.000000e+00> : vector<8xf32>
    %175 = vector.multi_reduction <add>, %174, %cst_45 [1] : vector<8x8xf32> to vector<8xf32>
    %176 = vector.shape_cast %175 : vector<8xf32> to vector<8x1xf32>
    %177 = tpu.reciprocal %176 {approx = true} : vector<8x1xf32> -> vector<8x1xf32>
    %178 = vector.broadcast %177 : vector<8x1xf32> to vector<8x8xf32>
    %179 = arith.mulf %174, %178 : vector<8x8xf32>
    %180 = arith.truncf %179 : vector<8x8xf32> to vector<8x8xbf16>
    %cst_46 = arith.constant dense<0.000000e+00> : vector<8x8xf32>
    %181 = tpu.matmul %180, %167, %cst_46 {dimension_numbers = #tpu.dot_dimension_numbers<[1], [0], [0], [1], [0, 0, 1, 1], [], []>} : vector<8x8xbf16>, vector<8x8xbf16>, vector<8x8xf32> -> vector<8x8xf32>
    %182 = arith.truncf %181 : vector<8x8xf32> to vector<8x8xbf16>
    %183 = vector.extract_strided_slice %15 {offsets = [16, 0], sizes = [8, 32], strides = [1, 1]} : vector<32x32xbf16> to vector<8x32xbf16>
    %cst_47 = arith.constant dense<0.000000e+00> : vector<8x32xf32>
    %184 = tpu.matmul %182, %183, %cst_47 {dimension_numbers = #tpu.dot_dimension_numbers<[1], [0], [0], [1], [0, 0, 1, 1], [], []>} : vector<8x8xbf16>, vector<8x32xbf16>, vector<8x32xf32> -> vector<8x32xf32>
    %185 = arith.addf %164, %184 : vector<8x32xf32>
    %186 = vector.extract_strided_slice %116 {offsets = [0, 24], sizes = [8, 8], strides = [1, 1]} : vector<8x32xbf16> to vector<8x8xbf16>
    %187 = vector.extract_strided_slice %119 {offsets = [0, 24], sizes = [8, 8], strides = [1, 1]} : vector<8x32xbf16> to vector<8x8xbf16>
    %188 = vector.extract_strided_slice %121 {offsets = [0, 24], sizes = [8, 8], strides = [1, 1]} : vector<8x32xbf16> to vector<8x8xbf16>
    %cst_48 = arith.constant dense<0.000000e+00> : vector<8x8xf32>
    %189 = tpu.matmul %186, %187, %cst_48 {dimension_numbers = #tpu.dot_dimension_numbers<[1], [1], [0], [0], [0, 0, 1, 0], [], []>} : vector<8x8xbf16>, vector<8x8xbf16>, vector<8x8xf32> -> vector<8x8xf32>
    %190 = arith.addf %189, %14 : vector<8x8xf32>
    %cst_49 = arith.constant dense<0xFF800000> : vector<8xf32>
    %191 = vector.multi_reduction <maximumf>, %190, %cst_49 [1] : vector<8x8xf32> to vector<8xf32>
    %192 = vector.shape_cast %191 : vector<8xf32> to vector<8x1xf32>
    %193 = vector.broadcast %192 : vector<8x1xf32> to vector<8x8xf32>
    %194 = arith.subf %190, %193 : vector<8x8xf32>
    %195 = math.exp %194 : vector<8x8xf32>
    %cst_50 = arith.constant dense<0.000000e+00> : vector<8xf32>
    %196 = vector.multi_reduction <add>, %195, %cst_50 [1] : vector<8x8xf32> to vector<8xf32>
    %197 = vector.shape_cast %196 : vector<8xf32> to vector<8x1xf32>
    %198 = tpu.reciprocal %197 {approx = true} : vector<8x1xf32> -> vector<8x1xf32>
    %199 = vector.broadcast %198 : vector<8x1xf32> to vector<8x8xf32>
    %200 = arith.mulf %195, %199 : vector<8x8xf32>
    %201 = arith.truncf %200 : vector<8x8xf32> to vector<8x8xbf16>
    %cst_51 = arith.constant dense<0.000000e+00> : vector<8x8xf32>
    %202 = tpu.matmul %201, %188, %cst_51 {dimension_numbers = #tpu.dot_dimension_numbers<[1], [0], [0], [1], [0, 0, 1, 1], [], []>} : vector<8x8xbf16>, vector<8x8xbf16>, vector<8x8xf32> -> vector<8x8xf32>
    %203 = arith.truncf %202 : vector<8x8xf32> to vector<8x8xbf16>
    %204 = vector.extract_strided_slice %15 {offsets = [24, 0], sizes = [8, 32], strides = [1, 1]} : vector<32x32xbf16> to vector<8x32xbf16>
    %cst_52 = arith.constant dense<0.000000e+00> : vector<8x32xf32>
    %205 = tpu.matmul %203, %204, %cst_52 {dimension_numbers = #tpu.dot_dimension_numbers<[1], [0], [0], [1], [0, 0, 1, 1], [], []>} : vector<8x8xbf16>, vector<8x32xbf16>, vector<8x32xf32> -> vector<8x32xf32>
    %206 = arith.addf %185, %205 : vector<8x32xf32>
    %c8 = arith.constant 8 : index
    %c0_53 = arith.constant 0 : index
    %207 = vector.load %arg5[%c8, %c0_53] : memref<16x32xf32, #tpu.memory_space<vmem>>, vector<8x32xf32>
    tpu.vector_store %arg5[%c8, %c0_53], %206 {strides = array<i32>} : memref<16x32xf32, #tpu.memory_space<vmem>>, vector<8x32xf32>,
    return
  }
  func.func @transform_0(%arg0: i32) -> (i32, i32) {
    %c0_i32 = arith.constant 0 : i32
    %c0_i32_0 = arith.constant 0 : i32
    return %arg0, %c0_i32 : i32, i32
  }
  func.func @transform_1(%arg0: i32) -> (i32, i32) {
    %c0_i32 = arith.constant 0 : i32
    %c0_i32_0 = arith.constant 0 : i32
    %c0_i32_1 = arith.constant 0 : i32
    return %c0_i32, %c0_i32_0 : i32, i32
  }
  func.func @transform_2(%arg0: i32) -> (i32, i32) {
    %c0_i32 = arith.constant 0 : i32
    %c0_i32_0 = arith.constant 0 : i32
    %c0_i32_1 = arith.constant 0 : i32
    return %c0_i32, %c0_i32_0 : i32, i32
  }
  func.func @transform_3(%arg0: i32) -> (i32, i32) {
    %c0_i32 = arith.constant 0 : i32
    %c0_i32_0 = arith.constant 0 : i32
    %c0_i32_1 = arith.constant 0 : i32
    return %c0_i32, %c0_i32_0 : i32, i32
  }
  func.func @transform_4(%arg0: i32) -> (i32, i32) {
    %c0_i32 = arith.constant 0 : i32
    %c0_i32_0 = arith.constant 0 : i32
    return %arg0, %c0_i32 : i32, i32
  }
}

</mosaic_0001>

<llo_original>
// kernel: decoder_layer_pallas.1
$region0: #{decoder_layer_pallas.1}
  #allocation0 [shape = 'u32[]', space=smem, size = 0x4, offset = 0x4, fixed_abs, tag = 'smem constant byte address 0x4 - core index']
  #allocation1 [shape = 'u32[72,128]{1,0:T(1,128)}', space=vmem, size = 0x9000, scoped, tag = 'internal scratch']
  %s0 = inlined_call_operand.vmem [shape: f32[16,32], index: 0, kind: input, shape index: {}]
  %s1 = inlined_call_operand.vmem [shape: bf16[32,96], index: 1, kind: input, shape index: {}]
  %s2 = inlined_call_operand.vmem [shape: bf16[32,32], index: 2, kind: input, shape index: {}]
  %s3 = inlined_call_operand.vmem [shape: bf16[8,32], index: 3, kind: input, shape index: {}]
  %s4 = inlined_call_operand.hbm [shape: f32[16,32], index: 4, kind: output, shape index: {}]
  %s5 = sld [smem:[#allocation0]]
  $region26: #{decoder_layer_pallas.1} parent=0
    _
  %s7 = ssub.s32 1, %s5
  %s8 = scalar_select 0, %s7, %s5
  $region1: #{decoder_layer_pallas.1} parent=0
    #allocation2 [shape = 'u8[8192]{0}', space=vmem, size = 0x2000, scoped, tag = 'output window, operand 0, single buffered']
    #allocation3 [shape = 's32[1]{0}', space=sflag, size = 0x4, scoped, tag = 'scoped memory for decoder_layer_pallas.1']
    %9 = vsyncpa [#allocation3], 0
    // Predicated region
    $region2: #{decoder_layer_pallas.1} parent=1 // pred_check
      _
    $region3: #{decoder_layer_pallas.1} parent=1 // pred_check_branch
      %11 = sbr.rel (0) target = $region5
    $region4: #{decoder_layer_pallas.1} parent=1 // pred_region
      _
    $region5: #{decoder_layer_pallas.1} parent=1 // pred_fallthru
      _
    // Predicated region
    $region6: #{decoder_layer_pallas.1} parent=1 // pred_check
      _
    $region7: #{decoder_layer_pallas.1} parent=1 // pred_check_branch
      %13 = sbr.rel (0) target = $region9
    $region8: #{decoder_layer_pallas.1} parent=1 // pred_region
      _
    $region9: #{decoder_layer_pallas.1} parent=1 // pred_fallthru
      _
    // Predicated region
    $region10: #{decoder_layer_pallas.1} parent=1 // pred_check
      _
    $region11: #{decoder_layer_pallas.1} parent=1 // pred_check_branch
      %15 = sbr.rel (0) target = $region13
    $region12: #{decoder_layer_pallas.1} parent=1 // pred_region
      _
    $region13: #{decoder_layer_pallas.1} parent=1 // pred_fallthru
      _
    // Predicated region
    $region14: #{decoder_layer_pallas.1} parent=1 // pred_check
      _
    $region15: #{decoder_layer_pallas.1} parent=1 // pred_check_branch
      %17 = sbr.rel (0) target = $region17
    $region16: #{decoder_layer_pallas.1} parent=1 // pred_region
      _
    $region17: #{decoder_layer_pallas.1} parent=1 // pred_fallthru
      _
    %v19 = vld [vmem:[%s0] sm:$0xff]
    %v20 = vld [vmem:[%s0 + $0x8] sm:$0xff]
    %v21 = vpack.c.bf16 %v20, %v19
    %v22 = vld [vmem:[%s3] sm:$0xf]
    %v23 = vunpack.c.l.bf16 %v22
    %v24 = vld [vmem:[%s1] sm:$0xf]
    %v25 = vld [vmem:[%s1 + $0x4] sm:$0xf]
    %v26 = vld [vmem:[%s1 + $0x8] sm:$0xf]
    %v27 = vld [vmem:[%s1 + $0xc] sm:$0xf]
    %v32 = vunpack.c.l.b16 %v24
    %v33 = vunpack.c.l.b16 %v25
    %v34 = vunpack.c.l.b16 %v26
    %v35 = vunpack.c.l.b16 %v27
    %v36 = vpack.c.b16 %v33, %v32
    %v37 = vpack.c.b16 %v35, %v34
    %vm40 = vcmask 261120
    %v42 = vsel %vm40, %v21, 0
    %44 = vmatpush.bf16.msra.mxu0 0
    %45 = vmatpush.bf16.msra.mxu0 0
    %46 = vmatpush.bf16.msra.mxu0 0
    %47 = vmatpush.bf16.msra.mxu0 0
    %48 = vmatpush.bf16.msra.mxu0 0
    %49 = vmatpush.bf16.msra.mxu0 0
    %50 = vmatpush.bf16.msra.mxu0 %v37
    %51 = vmatpush.bf16.msra.mxu0 %v36
    %52 = vmatmul.bf16.gmra.mxu0 %v42
    %v53 = vpop.f32.mrf.mxu0
    %v54 = vadd.f32 0.0, %v53
    %v55 = vpop.f32.mrf.mxu0
    %v56 = vadd.f32 0.0, %v55
    %57 = vdwg.mxu0
    %v58 = vlaneseq
    %v59 = vshrl.u32 %v58, 7
    %v60 = vlaneseq
    %v61 = vand.u32 %v60, 127
    %vm62 = vcmp.gt.s32.totalorder %v61, %v59
    %v63 = vsel %vm62, -1e+09, 0.0
    %v64 = vld [vmem:[%s2] sm:$0xf]
    %v65 = vld [vmem:[%s2 + $0x4] sm:$0xf]
    %v66 = vld [vmem:[%s2 + $0x8] sm:$0xf]
    %v67 = vld [vmem:[%s2 + $0xc] sm:$0xf]
    %v68 = vadd.f32 %v54, %v23
    %v69 = vmul.f32 %v68, 0.35355338
    %v70 = vpack.c.bf16 %v69, %v69
    %72 = vrot.lane.b32.xlu0 %v23, 32
    %v73 = vpop.permute.xlu0 %72
    %v75 = vadd.f32 %v54, %v73
    %v76 = vpack.c.bf16 %v75, %v75
    %v77 = vpack.c.bf16 %v54, %v54
    %v79 = vunpack.c.l.b16 %v76
    %v80 = vpack.c.b16 %v79, %v79
    %81 = vrot.lane.b32.xlu0 %v80, 96
    %v82 = vpop.permute.xlu0 %81
    %vm83 = vcmask 64512
    %v85 = vsel %vm83, %v70, 0
    %v88 = vsel %vm83, %v82, 0
    %90 = vmatpush.bf16.xpose.msra.mxu0 0
    %91 = vmatpush.bf16.xpose.msra.mxu0 0
    %92 = vmatpush.bf16.xpose.msra.mxu0 0
    %93 = vmatpush.bf16.xpose.msra.mxu0 0
    %94 = vmatpush.bf16.xpose.msra.mxu0 0
    %95 = vmatpush.bf16.xpose.msra.mxu0 0
    %96 = vmatpush.bf16.xpose.msra.mxu0 0
    %97 = vmatpush.bf16.xpose.msra.mxu0 %v88
    %98 = vmatmul.bf16.gmra.mxu0 %v85
    %v99 = vpop.f32.mrf.mxu0
    %v100 = vadd.f32 %v63, %v99
    %v101 = vpop.f32.mrf.mxu0
    %102 = vdwg.mxu0
    %v103 = vsel %vm83, %v100, -inf
    %104 = vmax.xlane.f32.xlu0 %v103
    %v105 = vpop.xlane.xlu0 %104
    %v106 = vsub.f32 %v100, %v105
    %v107 = vmul.f32 %v106, 1.442695
    %v108 = vpow.pop %v107
    %v109 = vsel %vm83, %v108, 0.0
    %110 = vadd.xlane.f32.xlu0 %v109
    %v111 = vpop.xlane.xlu0 %110
    %v112 = vrcp.pop %v111
    %v113 = vmul.f32 %v108, %v112
    %v114 = vpack.c.bf16 %v113, %v113
    %v116 = vunpack.c.l.b16 %v77
    %v117 = vpack.c.b16 %v116, %v116
    %118 = vrot.lane.b32.xlu0 %v117, 64
    %v119 = vpop.permute.xlu0 %118
    %v121 = vsel %vm83, %v114, 0
    %vm123 = vcmask 1043456
    %v125 = vsel %vm123, %v119, 0
    %127 = vmatpush.bf16.msra.mxu0 0
    %128 = vmatpush.bf16.msra.mxu0 0
    %129 = vmatpush.bf16.msra.mxu0 0
    %130 = vmatpush.bf16.msra.mxu0 0
    %131 = vmatpush.bf16.msra.mxu0 0
    %132 = vmatpush.bf16.msra.mxu0 0
    %133 = vmatpush.bf16.msra.mxu0 0
    %134 = vmatpush.bf16.msra.mxu0 %v125
    %135 = vmatmul.bf16.gmra.mxu0 %v121
    %v136 = vpop.f32.mrf.mxu0
    %v137 = vadd.f32 0.0, %v136
    %v138 = vpop.f32.mrf.mxu0
    %139 = vdwg.mxu0
    %v140 = vpack.c.bf16 %v137, %v137
    %v142 = vsel %vm83, %v140, 0
    %v145 = vsel %vm123, %v64, 0
    %147 = vmatpush.bf16.msra.mxu0 0
    %148 = vmatpush.bf16.msra.mxu0 0
    %149 = vmatpush.bf16.msra.mxu0 0
    %150 = vmatpush.bf16.msra.mxu0 0
    %151 = vmatpush.bf16.msra.mxu0 0
    %152 = vmatpush.bf16.msra.mxu0 0
    %153 = vmatpush.bf16.msra.mxu0 0
    %154 = vmatpush.bf16.msra.mxu0 %v145
    %155 = vmatmul.bf16.gmra.mxu0 %v142
    %v156 = vpop.f32.mrf.mxu0
    %v157 = vadd.f32 0.0, %v156
    %v158 = vpop.f32.mrf.mxu0
    %159 = vdwg.mxu0
    %v160 = vadd.f32 %v19, %v157
    %v162 = vunpack.c.l.b16 %v70
    %v163 = vpack.c.b16 %v162, %v162
    %164 = vrot.lane.b32.xlu0 %v163, 120
    %v165 = vpop.permute.xlu0 %164
    %166 = vrot.lane.b32.xlu0 %v80, 88
    %v167 = vpop.permute.xlu0 %166
    %v169 = vsel %vm83, %v165, 0
    %v172 = vsel %vm83, %v167, 0
    %174 = vmatpush.bf16.xpose.msra.mxu0 0
    %175 = vmatpush.bf16.xpose.msra.mxu0 0
    %176 = vmatpush.bf16.xpose.msra.mxu0 0
    %177 = vmatpush.bf16.xpose.msra.mxu0 0
    %178 = vmatpush.bf16.xpose.msra.mxu0 0
    %179 = vmatpush.bf16.xpose.msra.mxu0 0
    %180 = vmatpush.bf16.xpose.msra.mxu0 0
    %181 = vmatpush.bf16.xpose.msra.mxu0 %v172
    %182 = vmatmul.bf16.gmra.mxu0 %v169
    %v183 = vpop.f32.mrf.mxu0
    %v184 = vadd.f32 %v63, %v183
    %v185 = vpop.f32.mrf.mxu0
    %186 = vdwg.mxu0
    %v187 = vsel %vm83, %v184, -inf
    %188 = vmax.xlane.f32.xlu0 %v187
    %v189 = vpop.xlane.xlu0 %188
    %v190 = vsub.f32 %v184, %v189
    %v191 = vmul.f32 %v190, 1.442695
    %v192 = vpow.pop %v191
    %v193 = vsel %vm83, %v192, 0.0
    %194 = vadd.xlane.f32.xlu0 %v193
    %v195 = vpop.xlane.xlu0 %194
    %v196 = vrcp.pop %v195
    %v197 = vmul.f32 %v192, %v196
    %v198 = vpack.c.bf16 %v197, %v197
    %199 = vrot.lane.b32.xlu0 %v117, 56
    %v200 = vpop.permute.xlu0 %199
    %v202 = vsel %vm83, %v198, 0
    %v205 = vsel %vm123, %v200, 0
    %207 = vmatpush.bf16.msra.mxu0 0
    %208 = vmatpush.bf16.msra.mxu0 0
    %209 = vmatpush.bf16.msra.mxu0 0
    %210 = vmatpush.bf16.msra.mxu0 0
    %211 = vmatpush.bf16.msra.mxu0 0
    %212 = vmatpush.bf16.msra.mxu0 0
    %213 = vmatpush.bf16.msra.mxu0 0
    %214 = vmatpush.bf16.msra.mxu0 %v205
    %215 = vmatmul.bf16.gmra.mxu0 %v202
    %v216 = vpop.f32.mrf.mxu0
    %v217 = vadd.f32 0.0, %v216
    %v218 = vpop.f32.mrf.mxu0
    %219 = vdwg.mxu0
    %v220 = vpack.c.bf16 %v217, %v217
    %v222 = vsel %vm83, %v220, 0
    %v225 = vsel %vm123, %v65, 0
    %227 = vmatpush.bf16.msra.mxu0 0
    %228 = vmatpush.bf16.msra.mxu0 0
    %229 = vmatpush.bf16.msra.mxu0 0
    %230 = vmatpush.bf16.msra.mxu0 0
    %231 = vmatpush.bf16.msra.mxu0 0
    %232 = vmatpush.bf16.msra.mxu0 0
    %233 = vmatpush.bf16.msra.mxu0 0
    %234 = vmatpush.bf16.msra.mxu0 %v225
    %235 = vmatmul.bf16.gmra.mxu0 %v222
    %v236 = vpop.f32.mrf.mxu0
    %v237 = vadd.f32 0.0, %v236
    %v238 = vpop.f32.mrf.mxu0
    %239 = vdwg.mxu0
    %v240 = vadd.f32 %v160, %v237
    %241 = vrot.lane.b32.xlu0 %v163, 112
    %v242 = vpop.permute.xlu0 %241
    %243 = vrot.lane.b32.xlu0 %v80, 80
    %v244 = vpop.permute.xlu0 %243
    %v246 = vsel %vm83, %v242, 0
    %v249 = vsel %vm83, %v244, 0
    %251 = vmatpush.bf16.xpose.msra.mxu0 0
    %252 = vmatpush.bf16.xpose.msra.mxu0 0
    %253 = vmatpush.bf16.xpose.msra.mxu0 0
    %254 = vmatpush.bf16.xpose.msra.mxu0 0
    %255 = vmatpush.bf16.xpose.msra.mxu0 0
    %256 = vmatpush.bf16.xpose.msra.mxu0 0
    %257 = vmatpush.bf16.xpose.msra.mxu0 0
    %258 = vmatpush.bf16.xpose.msra.mxu0 %v249
    %259 = vmatmul.bf16.gmra.mxu0 %v246
    %v260 = vpop.f32.mrf.mxu0
    %v261 = vadd.f32 %v63, %v260
    %v262 = vpop.f32.mrf.mxu0
    %263 = vdwg.mxu0
    %v264 = vsel %vm83, %v261, -inf
    %265 = vmax.xlane.f32.xlu0 %v264
    %v266 = vpop.xlane.xlu0 %265
    %v267 = vsub.f32 %v261, %v266
    %v268 = vmul.f32 %v267, 1.442695
    %v269 = vpow.pop %v268
    %v270 = vsel %vm83, %v269, 0.0
    %271 = vadd.xlane.f32.xlu0 %v270
    %v272 = vpop.xlane.xlu0 %271
    %v273 = vrcp.pop %v272
    %v274 = vmul.f32 %v269, %v273
    %v275 = vpack.c.bf16 %v274, %v274
    %276 = vrot.lane.b32.xlu0 %v117, 48
    %v277 = vpop.permute.xlu0 %276
    %v279 = vsel %vm83, %v275, 0
    %v282 = vsel %vm123, %v277, 0
    %284 = vmatpush.bf16.msra.mxu0 0
    %285 = vmatpush.bf16.msra.mxu0 0
    %286 = vmatpush.bf16.msra.mxu0 0
    %287 = vmatpush.bf16.msra.mxu0 0
    %288 = vmatpush.bf16.msra.mxu0 0
    %289 = vmatpush.bf16.msra.mxu0 0
    %290 = vmatpush.bf16.msra.mxu0 0
    %291 = vmatpush.bf16.msra.mxu0 %v282
    %292 = vmatmul.bf16.gmra.mxu0 %v279
    %v293 = vpop.f32.mrf.mxu0
    %v294 = vadd.f32 0.0, %v293
    %v295 = vpop.f32.mrf.mxu0
    %296 = vdwg.mxu0
    %v297 = vpack.c.bf16 %v294, %v294
    %v299 = vsel %vm83, %v297, 0
    %v302 = vsel %vm123, %v66, 0
    %304 = vmatpush.bf16.msra.mxu0 0
    %305 = vmatpush.bf16.msra.mxu0 0
    %306 = vmatpush.bf16.msra.mxu0 0
    %307 = vmatpush.bf16.msra.mxu0 0
    %308 = vmatpush.bf16.msra.mxu0 0
    %309 = vmatpush.bf16.msra.mxu0 0
    %310 = vmatpush.bf16.msra.mxu0 0
    %311 = vmatpush.bf16.msra.mxu0 %v302
    %312 = vmatmul.bf16.gmra.mxu0 %v299
    %v313 = vpop.f32.mrf.mxu0
    %v314 = vadd.f32 0.0, %v313
    %v315 = vpop.f32.mrf.mxu0
    %316 = vdwg.mxu0
    %v317 = vadd.f32 %v240, %v314
    %318 = vrot.lane.b32.xlu0 %v163, 104
    %v319 = vpop.permute.xlu0 %318
    %320 = vrot.lane.b32.xlu0 %v80, 72
    %v321 = vpop.permute.xlu0 %320
    %v323 = vsel %vm83, %v319, 0
    %v326 = vsel %vm83, %v321, 0
    %328 = vmatpush.bf16.xpose.msra.mxu0 0
    %329 = vmatpush.bf16.xpose.msra.mxu0 0
    %330 = vmatpush.bf16.xpose.msra.mxu0 0
    %331 = vmatpush.bf16.xpose.msra.mxu0 0
    %332 = vmatpush.bf16.xpose.msra.mxu0 0
    %333 = vmatpush.bf16.xpose.msra.mxu0 0
    %334 = vmatpush.bf16.xpose.msra.mxu0 0
    %335 = vmatpush.bf16.xpose.msra.mxu0 %v326
    %336 = vmatmul.bf16.gmra.mxu0 %v323
    %v337 = vpop.f32.mrf.mxu0
    %v338 = vadd.f32 %v63, %v337
    %v339 = vpop.f32.mrf.mxu0
    %340 = vdwg.mxu0
    %v341 = vsel %vm83, %v338, -inf
    %342 = vmax.xlane.f32.xlu0 %v341
    %v343 = vpop.xlane.xlu0 %342
    %v344 = vsub.f32 %v338, %v343
    %v345 = vmul.f32 %v344, 1.442695
    %v346 = vpow.pop %v345
    %v347 = vsel %vm83, %v346, 0.0
    %348 = vadd.xlane.f32.xlu0 %v347
    %v349 = vpop.xlane.xlu0 %348
    %v350 = vrcp.pop %v349
    %v351 = vmul.f32 %v346, %v350
    %v352 = vpack.c.bf16 %v351, %v351
    %353 = vrot.lane.b32.xlu0 %v117, 40
    %v354 = vpop.permute.xlu0 %353
    %v356 = vsel %vm83, %v352, 0
    %v359 = vsel %vm123, %v354, 0
    %361 = vmatpush.bf16.msra.mxu0 0
    %362 = vmatpush.bf16.msra.mxu0 0
    %363 = vmatpush.bf16.msra.mxu0 0
    %364 = vmatpush.bf16.msra.mxu0 0
    %365 = vmatpush.bf16.msra.mxu0 0
    %366 = vmatpush.bf16.msra.mxu0 0
    %367 = vmatpush.bf16.msra.mxu0 0
    %368 = vmatpush.bf16.msra.mxu0 %v359
    %369 = vmatmul.bf16.gmra.mxu0 %v356
    %v370 = vpop.f32.mrf.mxu0
    %v371 = vadd.f32 0.0, %v370
    %v372 = vpop.f32.mrf.mxu0
    %373 = vdwg.mxu0
    %v374 = vpack.c.bf16 %v371, %v371
    %v376 = vsel %vm83, %v374, 0
    %v379 = vsel %vm123, %v67, 0
    %381 = vmatpush.bf16.msra.mxu0 0
    %382 = vmatpush.bf16.msra.mxu0 0
    %383 = vmatpush.bf16.msra.mxu0 0
    %384 = vmatpush.bf16.msra.mxu0 0
    %385 = vmatpush.bf16.msra.mxu0 0
    %386 = vmatpush.bf16.msra.mxu0 0
    %387 = vmatpush.bf16.msra.mxu0 0
    %388 = vmatpush.bf16.msra.mxu0 %v379
    %389 = vmatmul.bf16.gmra.mxu0 %v376
    %v390 = vpop.f32.mrf.mxu0
    %v391 = vadd.f32 0.0, %v390
    %v392 = vpop.f32.mrf.mxu0
    %393 = vdwg.mxu0
    %v394 = vadd.f32 %v317, %v391
    %395 = vst.msk [vmem:[#allocation2] sm:$0xff] %vm40, %v394
    %v396 = vadd.f32 %v56, %v23
    %v397 = vmul.f32 %v396, 0.35355338
    %v398 = vpack.c.bf16 %v397, %v397
    %v399 = vadd.f32 %v56, %v73
    %v400 = vpack.c.bf16 %v399, %v399
    %v401 = vpack.c.bf16 %v56, %v56
    %v403 = vunpack.c.l.b16 %v400
    %v404 = vpack.c.b16 %v403, %v403
    %405 = vrot.lane.b32.xlu0 %v404, 96
    %v406 = vpop.permute.xlu0 %405
    %v408 = vsel %vm83, %v398, 0
    %v411 = vsel %vm83, %v406, 0
    %413 = vmatpush.bf16.xpose.msra.mxu0 0
    %414 = vmatpush.bf16.xpose.msra.mxu0 0
    %415 = vmatpush.bf16.xpose.msra.mxu0 0
    %416 = vmatpush.bf16.xpose.msra.mxu0 0
    %417 = vmatpush.bf16.xpose.msra.mxu0 0
    %418 = vmatpush.bf16.xpose.msra.mxu0 0
    %419 = vmatpush.bf16.xpose.msra.mxu0 0
    %420 = vmatpush.bf16.xpose.msra.mxu0 %v411
    %421 = vmatmul.bf16.gmra.mxu0 %v408
    %v422 = vpop.f32.mrf.mxu0
    %v423 = vadd.f32 %v63, %v422
    %v424 = vpop.f32.mrf.mxu0
    %425 = vdwg.mxu0
    %v426 = vsel %vm83, %v423, -inf
    %427 = vmax.xlane.f32.xlu0 %v426
    %v428 = vpop.xlane.xlu0 %427
    %v429 = vsub.f32 %v423, %v428
    %v430 = vmul.f32 %v429, 1.442695
    %v431 = vpow.pop %v430
    %v432 = vsel %vm83, %v431, 0.0
    %433 = vadd.xlane.f32.xlu0 %v432
    %v434 = vpop.xlane.xlu0 %433
    %v435 = vrcp.pop %v434
    %v436 = vmul.f32 %v431, %v435
    %v437 = vpack.c.bf16 %v436, %v436
    %v439 = vunpack.c.l.b16 %v401
    %v440 = vpack.c.b16 %v439, %v439
    %441 = vrot.lane.b32.xlu0 %v440, 64
    %v442 = vpop.permute.xlu0 %441
    %v444 = vsel %vm83, %v437, 0
    %v447 = vsel %vm123, %v442, 0
    %449 = vmatpush.bf16.msra.mxu0 0
    %450 = vmatpush.bf16.msra.mxu0 0
    %451 = vmatpush.bf16.msra.mxu0 0
    %452 = vmatpush.bf16.msra.mxu0 0
    %453 = vmatpush.bf16.msra.mxu0 0
    %454 = vmatpush.bf16.msra.mxu0 0
    %455 = vmatpush.bf16.msra.mxu0 0
    %456 = vmatpush.bf16.msra.mxu0 %v447
    %457 = vmatmul.bf16.gmra.mxu0 %v444
    %v458 = vpop.f32.mrf.mxu0
    %v459 = vadd.f32 0.0, %v458
    %v460 = vpop.f32.mrf.mxu0
    %461 = vdwg.mxu0
    %v462 = vpack.c.bf16 %v459, %v459
    %v464 = vsel %vm83, %v462, 0
    %466 = vmatpush.bf16.msra.mxu0 0
    %467 = vmatpush.bf16.msra.mxu0 0
    %468 = vmatpush.bf16.msra.mxu0 0
    %469 = vmatpush.bf16.msra.mxu0 0
    %470 = vmatpush.bf16.msra.mxu0 0
    %471 = vmatpush.bf16.msra.mxu0 0
    %472 = vmatpush.bf16.msra.mxu0 0
    %473 = vmatpush.bf16.msra.mxu0 %v145
    %474 = vmatmul.bf16.gmra.mxu0 %v464
    %v475 = vpop.f32.mrf.mxu0
    %v476 = vadd.f32 0.0, %v475
    %v477 = vpop.f32.mrf.mxu0
    %478 = vdwg.mxu0
    %v479 = vadd.f32 %v20, %v476
    %v481 = vunpack.c.l.b16 %v398
    %v482 = vpack.c.b16 %v481, %v481
    %483 = vrot.lane.b32.xlu0 %v482, 120
    %v484 = vpop.permute.xlu0 %483
    %485 = vrot.lane.b32.xlu0 %v404, 88
    %v486 = vpop.permute.xlu0 %485
    %v488 = vsel %vm83, %v484, 0
    %v491 = vsel %vm83, %v486, 0
    %493 = vmatpush.bf16.xpose.msra.mxu0 0
    %494 = vmatpush.bf16.xpose.msra.mxu0 0
    %495 = vmatpush.bf16.xpose.msra.mxu0 0
    %496 = vmatpush.bf16.xpose.msra.mxu0 0
    %497 = vmatpush.bf16.xpose.msra.mxu0 0
    %498 = vmatpush.bf16.xpose.msra.mxu0 0
    %499 = vmatpush.bf16.xpose.msra.mxu0 0
    %500 = vmatpush.bf16.xpose.msra.mxu0 %v491
    %501 = vmatmul.bf16.gmra.mxu0 %v488
    %v502 = vpop.f32.mrf.mxu0
    %v503 = vadd.f32 %v63, %v502
    %v504 = vpop.f32.mrf.mxu0
    %505 = vdwg.mxu0
    %v506 = vsel %vm83, %v503, -inf
    %507 = vmax.xlane.f32.xlu0 %v506
    %v508 = vpop.xlane.xlu0 %507
    %v509 = vsub.f32 %v503, %v508
    %v510 = vmul.f32 %v509, 1.442695
    %v511 = vpow.pop %v510
    %v512 = vsel %vm83, %v511, 0.0
    %513 = vadd.xlane.f32.xlu0 %v512
    %v514 = vpop.xlane.xlu0 %513
    %v515 = vrcp.pop %v514
    %v516 = vmul.f32 %v511, %v515
    %v517 = vpack.c.bf16 %v516, %v516
    %518 = vrot.lane.b32.xlu0 %v440, 56
    %v519 = vpop.permute.xlu0 %518
    %v521 = vsel %vm83, %v517, 0
    %v524 = vsel %vm123, %v519, 0
    %526 = vmatpush.bf16.msra.mxu0 0
    %527 = vmatpush.bf16.msra.mxu0 0
    %528 = vmatpush.bf16.msra.mxu0 0
    %529 = vmatpush.bf16.msra.mxu0 0
    %530 = vmatpush.bf16.msra.mxu0 0
    %531 = vmatpush.bf16.msra.mxu0 0
    %532 = vmatpush.bf16.msra.mxu0 0
    %533 = vmatpush.bf16.msra.mxu0 %v524
    %534 = vmatmul.bf16.gmra.mxu0 %v521
    %v535 = vpop.f32.mrf.mxu0
    %v536 = vadd.f32 0.0, %v535
    %v537 = vpop.f32.mrf.mxu0
    %538 = vdwg.mxu0
    %v539 = vpack.c.bf16 %v536, %v536
    %v541 = vsel %vm83, %v539, 0
    %543 = vmatpush.bf16.msra.mxu0 0
    %544 = vmatpush.bf16.msra.mxu0 0
    %545 = vmatpush.bf16.msra.mxu0 0
    %546 = vmatpush.bf16.msra.mxu0 0
    %547 = vmatpush.bf16.msra.mxu0 0
    %548 = vmatpush.bf16.msra.mxu0 0
    %549 = vmatpush.bf16.msra.mxu0 0
    %550 = vmatpush.bf16.msra.mxu0 %v225
    %551 = vmatmul.bf16.gmra.mxu0 %v541
    %v552 = vpop.f32.mrf.mxu0
    %v553 = vadd.f32 0.0, %v552
    %v554 = vpop.f32.mrf.mxu0
    %555 = vdwg.mxu0
    %v556 = vadd.f32 %v479, %v553
    %557 = vrot.lane.b32.xlu0 %v482, 112
    %v558 = vpop.permute.xlu0 %557
    %559 = vrot.lane.b32.xlu0 %v404, 80
    %v560 = vpop.permute.xlu0 %559
    %v562 = vsel %vm83, %v558, 0
    %v565 = vsel %vm83, %v560, 0
    %567 = vmatpush.bf16.xpose.msra.mxu0 0
    %568 = vmatpush.bf16.xpose.msra.mxu0 0
    %569 = vmatpush.bf16.xpose.msra.mxu0 0
    %570 = vmatpush.bf16.xpose.msra.mxu0 0
    %571 = vmatpush.bf16.xpose.msra.mxu0 0
    %572 = vmatpush.bf16.xpose.msra.mxu0 0
    %573 = vmatpush.bf16.xpose.msra.mxu0 0
    %574 = vmatpush.bf16.xpose.msra.mxu0 %v565
    %575 = vmatmul.bf16.gmra.mxu0 %v562
    %v576 = vpop.f32.mrf.mxu0
    %v577 = vadd.f32 %v63, %v576
    %v578 = vpop.f32.mrf.mxu0
    %579 = vdwg.mxu0
    %v580 = vsel %vm83, %v577, -inf
    %581 = vmax.xlane.f32.xlu0 %v580
    %v582 = vpop.xlane.xlu0 %581
    %v583 = vsub.f32 %v577, %v582
    %v584 = vmul.f32 %v583, 1.442695
    %v585 = vpow.pop %v584
    %v586 = vsel %vm83, %v585, 0.0
    %587 = vadd.xlane.f32.xlu0 %v586
    %v588 = vpop.xlane.xlu0 %587
    %v589 = vrcp.pop %v588
    %v590 = vmul.f32 %v585, %v589
    %v591 = vpack.c.bf16 %v590, %v590
    %592 = vrot.lane.b32.xlu0 %v440, 48
    %v593 = vpop.permute.xlu0 %592
    %v595 = vsel %vm83, %v591, 0
    %v598 = vsel %vm123, %v593, 0
    %600 = vmatpush.bf16.msra.mxu0 0
    %601 = vmatpush.bf16.msra.mxu0 0
    %602 = vmatpush.bf16.msra.mxu0 0
    %603 = vmatpush.bf16.msra.mxu0 0
    %604 = vmatpush.bf16.msra.mxu0 0
    %605 = vmatpush.bf16.msra.mxu0 0
    %606 = vmatpush.bf16.msra.mxu0 0
    %607 = vmatpush.bf16.msra.mxu0 %v598
    %608 = vmatmul.bf16.gmra.mxu0 %v595
    %v609 = vpop.f32.mrf.mxu0
    %v610 = vadd.f32 0.0, %v609
    %v611 = vpop.f32.mrf.mxu0
    %612 = vdwg.mxu0
    %v613 = vpack.c.bf16 %v610, %v610
    %v615 = vsel %vm83, %v613, 0
    %617 = vmatpush.bf16.msra.mxu0 0
    %618 = vmatpush.bf16.msra.mxu0 0
    %619 = vmatpush.bf16.msra.mxu0 0
    %620 = vmatpush.bf16.msra.mxu0 0
    %621 = vmatpush.bf16.msra.mxu0 0
    %622 = vmatpush.bf16.msra.mxu0 0
    %623 = vmatpush.bf16.msra.mxu0 0
    %624 = vmatpush.bf16.msra.mxu0 %v302
    %625 = vmatmul.bf16.gmra.mxu0 %v615
    %v626 = vpop.f32.mrf.mxu0
    %v627 = vadd.f32 0.0, %v626
    %v628 = vpop.f32.mrf.mxu0
    %629 = vdwg.mxu0
    %v630 = vadd.f32 %v556, %v627
    %631 = vrot.lane.b32.xlu0 %v482, 104
    %v632 = vpop.permute.xlu0 %631
    %633 = vrot.lane.b32.xlu0 %v404, 72
    %v634 = vpop.permute.xlu0 %633
    %v636 = vsel %vm83, %v632, 0
    %v639 = vsel %vm83, %v634, 0
    %641 = vmatpush.bf16.xpose.msra.mxu0 0
    %642 = vmatpush.bf16.xpose.msra.mxu0 0
    %643 = vmatpush.bf16.xpose.msra.mxu0 0
    %644 = vmatpush.bf16.xpose.msra.mxu0 0
    %645 = vmatpush.bf16.xpose.msra.mxu0 0
    %646 = vmatpush.bf16.xpose.msra.mxu0 0
    %647 = vmatpush.bf16.xpose.msra.mxu0 0
    %648 = vmatpush.bf16.xpose.msra.mxu0 %v639
    %649 = vmatmul.bf16.gmra.mxu0 %v636
    %v650 = vpop.f32.mrf.mxu0
    %v651 = vadd.f32 %v63, %v650
    %v652 = vpop.f32.mrf.mxu0
    %653 = vdwg.mxu0
    %v654 = vsel %vm83, %v651, -inf
    %655 = vmax.xlane.f32.xlu0 %v654
    %v656 = vpop.xlane.xlu0 %655
    %v657 = vsub.f32 %v651, %v656
    %v658 = vmul.f32 %v657, 1.442695
    %v659 = vpow.pop %v658
    %v660 = vsel %vm83, %v659, 0.0
    %661 = vadd.xlane.f32.xlu0 %v660
    %v662 = vpop.xlane.xlu0 %661
    %v663 = vrcp.pop %v662
    %v664 = vmul.f32 %v659, %v663
    %v665 = vpack.c.bf16 %v664, %v664
    %666 = vrot.lane.b32.xlu0 %v440, 40
    %v667 = vpop.permute.xlu0 %666
    %v669 = vsel %vm83, %v665, 0
    %v672 = vsel %vm123, %v667, 0
    %674 = vmatpush.bf16.msra.mxu0 0
    %675 = vmatpush.bf16.msra.mxu0 0
    %676 = vmatpush.bf16.msra.mxu0 0
    %677 = vmatpush.bf16.msra.mxu0 0
    %678 = vmatpush.bf16.msra.mxu0 0
    %679 = vmatpush.bf16.msra.mxu0 0
    %680 = vmatpush.bf16.msra.mxu0 0
    %681 = vmatpush.bf16.msra.mxu0 %v672
    %682 = vmatmul.bf16.gmra.mxu0 %v669
    %v683 = vpop.f32.mrf.mxu0
    %v684 = vadd.f32 0.0, %v683
    %v685 = vpop.f32.mrf.mxu0
    %686 = vdwg.mxu0
    %v687 = vpack.c.bf16 %v684, %v684
    %v689 = vsel %vm83, %v687, 0
    %691 = vmatpush.bf16.msra.mxu0 0
    %692 = vmatpush.bf16.msra.mxu0 0
    %693 = vmatpush.bf16.msra.mxu0 0
    %694 = vmatpush.bf16.msra.mxu0 0
    %695 = vmatpush.bf16.msra.mxu0 0
    %696 = vmatpush.bf16.msra.mxu0 0
    %697 = vmatpush.bf16.msra.mxu0 0
    %698 = vmatpush.bf16.msra.mxu0 %v379
    %699 = vmatmul.bf16.gmra.mxu0 %v689
    %v700 = vpop.f32.mrf.mxu0
    %v701 = vadd.f32 0.0, %v700
    %v702 = vpop.f32.mrf.mxu0
    %703 = vdwg.mxu0
    %v704 = vadd.f32 %v630, %v701
    %705 = vst.msk [vmem:[#allocation2 + $0x8] sm:$0xff] %vm40, %v704
    // Predicated region
    $region18: #{decoder_layer_pallas.1} parent=1 // pred_check
      _
    $region19: #{decoder_layer_pallas.1} parent=1 // pred_check_branch
      %707 = sbr.rel (0) target = $region21
    $region20: #{decoder_layer_pallas.1} parent=1 // pred_region
      %709 = vsyncadd [#allocation3], 0
      %s710 = sshll.u32 [#allocation2], 4
      %s711 = int_to_ptr.vmem [resolvable:$true] %s710
      %s712 = sshll.u32 %s4, 4
      %s713 = int_to_ptr.hbm [resolvable:$true] %s712
      %718 = dma.vmem_to_hbm [thread:$0]  %s711, 256, %s713, [#allocation3], 128, 128, 8
    $region21: #{decoder_layer_pallas.1} parent=1 // pred_fallthru
      _
    // Predicated region
    $region22: #{decoder_layer_pallas.1} parent=1 // pred_check
      _
    $region23: #{decoder_layer_pallas.1} parent=1 // pred_check_branch
      %720 = sbr.rel (0) target = $region25
    $region24: #{decoder_layer_pallas.1} parent=1 // pred_region
      %722 = dma.done [#allocation3], 256
    $region25: #{decoder_layer_pallas.1} parent=1 // pred_fallthru
      _
    %723 = vsyncpa [#allocation3], 1

</llo_original>
